<compile_context>
chip_gen: v5e
topology: v5e:2x2
jax: 0.10.0
libtpu: 0.0.40
codegen_flags: <defaults>
</compile_context>

<pallas_src>
import functools

import jax
import jax.numpy as jnp
from jax.experimental import pallas as pl
from jax.experimental.pallas import tpu as pltpu  # noqa: F401  (TPU backend)


def _round_up(v, m):
    return ((v + m - 1) // m) * m


# ----------------------------- Pallas kernel ------------------------------- #

def _ae_fused_kernel(a_ref, x_ref, w1_ref, b1_ref, w23_ref, b23_ref,
                     muvar_ref, adj_ref, *, out_dim):
    """Fused: conv1 -> merged conv2|conv3 -> inner-product decoder."""
    f32 = jnp.float32
    bf16 = jnp.bfloat16

    a = a_ref[...]                                           # bf16 [Np, Np]

    # ---- conv1: x1 = sigmoid((A_hat @ X) @ W1 + b1) ----
    ax = jnp.dot(a, x_ref[...], preferred_element_type=f32)  # [Np, Fp] f32
    x1 = jax.nn.sigmoid(
        jnp.dot(ax.astype(bf16), w1_ref[...], preferred_element_type=f32)
        + b1_ref[...])                                       # [Np, Hp] f32

    # ---- merged conv2|conv3: sigmoid(A_hat @ (x1 @ [W2|W3]) + [b2|b3]) ----
    x1w = jnp.dot(x1.astype(bf16), w23_ref[...],
                  preferred_element_type=f32)                # [Np, Cp] f32
    muvar = jax.nn.sigmoid(
        jnp.dot(a, x1w.astype(bf16), preferred_element_type=f32)
        + b23_ref[...])                                      # [Np, Cp] f32
    muvar_ref[...] = muvar

    # ---- decoder: adj = sigmoid(Z @ Z.T), z = mu = columns [0, out_dim) ----
    # Zero out padded / logvar columns so the contraction only spans mu.
    col = jax.lax.broadcasted_iota(jnp.int32, muvar.shape, 1)
    z = jnp.where(col < out_dim, muvar, 0.0).astype(bf16)    # [Np, Cp] bf16
    adj_ref[...] = jax.nn.sigmoid(
        jax.lax.dot_general(z, z, (((1,), (1,)), ((), ())),
                            preferred_element_type=f32))     # [Np, Np] f32


# ------------------------------ wrapper ------------------------------------ #

@jax.jit
def ae_forward(x, a_hat, params):
    n, feat = x.shape
    hid = params["w1"].shape[1]
    out_dim = params["w2"].shape[1]

    # Pad everything to (8,128)-friendly, lane-dense shapes.
    np_ = _round_up(n, 128)
    fp = _round_up(feat, 128)
    hp = _round_up(hid, 128)
    cp = _round_up(2 * out_dim, 128)

    bf16 = jnp.bfloat16
    f32 = jnp.float32

    a_p = jnp.zeros((np_, np_), bf16).at[:n, :n].set(a_hat.astype(bf16))
    x_p = jnp.zeros((np_, fp), bf16).at[:n, :feat].set(x.astype(bf16))
    w1_p = jnp.zeros((fp, hp), bf16).at[:feat, :hid].set(
        params["w1"].astype(bf16))
    b1_p = jnp.zeros((1, hp), f32).at[:, :hid].set(params["b1"])

    w23 = jnp.concatenate([params["w2"], params["w3"]], axis=1)
    b23 = jnp.concatenate([params["b2"], params["b3"]], axis=1)
    w23_p = jnp.zeros((hp, cp), bf16).at[:hid, :2 * out_dim].set(
        w23.astype(bf16))
    b23_p = jnp.zeros((1, cp), f32).at[:, :2 * out_dim].set(b23)

    kernel = functools.partial(_ae_fused_kernel, out_dim=out_dim)
    muvar_p, adj_p = pl.pallas_call(
        kernel,
        out_shape=(jax.ShapeDtypeStruct((np_, cp), f32),
                   jax.ShapeDtypeStruct((np_, np_), f32)),
        # Single grid point (grid=()), full-array blocks: shapes are small and
        # everything fits VMEM; index maps take no grid arguments.
        in_specs=[
            pl.BlockSpec((np_, np_), lambda: (0, 0)),
            pl.BlockSpec((np_, fp), lambda: (0, 0)),
            pl.BlockSpec((fp, hp), lambda: (0, 0)),
            pl.BlockSpec((1, hp), lambda: (0, 0)),
            pl.BlockSpec((hp, cp), lambda: (0, 0)),
            pl.BlockSpec((1, cp), lambda: (0, 0)),
        ],
        out_specs=(pl.BlockSpec((np_, cp), lambda: (0, 0)),
                   pl.BlockSpec((np_, np_), lambda: (0, 0))),
    )(a_p, x_p, w1_p, b1_p, w23_p, b23_p)

    mu = muvar_p[:n, :out_dim]
    logvar = muvar_p[:n, out_dim:2 * out_dim]
    z = mu
    adj = adj_p[:n, :n]
    return mu, logvar, z, adj


# ------------------------------ glue (plain JAX) ---------------------------- #

def gcn_norm_dense(edge_index, edge_weight, num_nodes):
    """Dense D^{-1/2} (A + I) D^{-1/2} with edge weights (PyG gcn_norm)."""
    src = edge_index[0]
    dst = edge_index[1]
    a = jnp.zeros((num_nodes, num_nodes), jnp.float32)
    a = a.at[dst, src].add(edge_weight.astype(jnp.float32))
    a = a + jnp.eye(num_nodes, dtype=jnp.float32)          # self loops, weight 1
    deg = a.sum(axis=1)
    d_inv_sqrt = jnp.where(deg > 0, 1.0 / jnp.sqrt(deg), 0.0)
    return d_inv_sqrt[:, None] * a * d_inv_sqrt[None, :]


def init_params(key, feat_dim, hid_dim, out_dim):
    """Deterministic (glorot-ish) init of the three GCNConv layers."""
    ks = jax.random.split(key, 3)

    def glorot(k, fan_in, fan_out):
        lim = jnp.sqrt(6.0 / (fan_in + fan_out))
        return jax.random.uniform(k, (fan_in, fan_out), jnp.float32, -lim, lim)

    return {
        "w1": glorot(ks[0], feat_dim, hid_dim),
        "b1": jnp.zeros((1, hid_dim), jnp.float32),
        "w2": glorot(ks[1], hid_dim, out_dim),
        "b2": jnp.zeros((1, out_dim), jnp.float32),
        "w3": glorot(ks[2], hid_dim, out_dim),
        "b3": jnp.zeros((1, out_dim), jnp.float32),
    }


def ae_forward_ref(x, a_hat, params):
    """Pure-JAX f32 reference (same eval-mode semantics)."""
    x1 = jax.nn.sigmoid(a_hat @ x @ params["w1"] + params["b1"])
    mu = jax.nn.sigmoid(a_hat @ x1 @ params["w2"] + params["b2"])
    logvar = jax.nn.sigmoid(a_hat @ x1 @ params["w3"] + params["b3"])
    z = mu
    adj = jax.nn.sigmoid(z @ z.T)
    return mu, logvar, z, adj


# ---------------------------------- main ------------------------------------ #

if __name__ == "__main__":
    N, FEAT, HID, OUT = 8, 16, 32, 8

    key = jax.random.PRNGKey(0)
    k_x, k_w, k_ew = jax.random.split(key, 3)

    # node features
    x = jax.random.normal(k_x, (N, FEAT), jnp.float32)

    # simple symmetric ring graph: edges (i, i+1) and (i+1, i)
    src = jnp.arange(N, dtype=jnp.int32)
    dst = (src + 1) % N
    edge_index = jnp.stack(
        [jnp.concatenate([src, dst]), jnp.concatenate([dst, src])], axis=0)
    ew_half = jax.random.uniform(k_ew, (N,), jnp.float32, 0.5, 1.5)
    edge_weight = jnp.concatenate([ew_half, ew_half])  # symmetric weights

    a_hat = gcn_norm_dense(edge_index, edge_weight, N)
    params = init_params(k_w, FEAT, HID, OUT)

    mu, logvar, z, adj = ae_forward(x, a_hat, params)
    jax.block_until_ready((mu, logvar, z, adj))

    assert mu.shape == (N, OUT) and logvar.shape == (N, OUT)
    assert z.shape == (N, OUT) and adj.shape == (N, N)
    assert bool(jnp.all(jnp.isfinite(adj)))

    # Numerical sanity check vs. the pure-JAX f32 reference (bf16 MXU inputs).
    mu_r, lv_r, z_r, adj_r = ae_forward_ref(x, a_hat, params)
    assert bool(jnp.allclose(mu, mu_r, atol=5e-2))
    assert bool(jnp.allclose(logvar, lv_r, atol=5e-2))
    assert bool(jnp.allclose(adj, adj_r, atol=5e-2))

    print("KERNEL_OK")
</pallas_src>

<mosaic_0001>
module attributes {stable_mosaic.version = 11 : i64} {
  func.func @_ae_fused_kernel(%arg0: memref<128x128xbf16, #tpu.memory_space<vmem>>, %arg1: memref<128x128xbf16, #tpu.memory_space<vmem>>, %arg2: memref<128x128xbf16, #tpu.memory_space<vmem>>, %arg3: memref<1x128xf32, #tpu.memory_space<vmem>>, %arg4: memref<128x128xbf16, #tpu.memory_space<vmem>>, %arg5: memref<1x128xf32, #tpu.memory_space<vmem>>, %arg6: memref<128x128xf32, #tpu.memory_space<vmem>>, %arg7: memref<128x128xf32, #tpu.memory_space<vmem>>) attributes {dimension_semantics = [], scalar_prefetch = 0 : i64, scratch_operands = 0 : i64, tpu.core_type = #tpu.core_type<tc>} {
    %c0 = arith.constant 0 : index
    %c0_0 = arith.constant 0 : index
    %0 = vector.load %arg0[%c0, %c0_0] : memref<128x128xbf16, #tpu.memory_space<vmem>>, vector<128x128xbf16>
    %c0_1 = arith.constant 0 : index
    %c0_2 = arith.constant 0 : index
    %1 = vector.load %arg1[%c0_1, %c0_2] : memref<128x128xbf16, #tpu.memory_space<vmem>>, vector<128x128xbf16>
    %cst = arith.constant dense<0.000000e+00> : vector<128x128xf32>
    %2 = tpu.matmul %0, %1, %cst {dimension_numbers = #tpu.dot_dimension_numbers<[1], [0], [0], [1], [0, 0, 1, 1], [], []>} : vector<128x128xbf16>, vector<128x128xbf16>, vector<128x128xf32> -> vector<128x128xf32>
    %3 = arith.truncf %2 : vector<128x128xf32> to vector<128x128xbf16>
    %c0_3 = arith.constant 0 : index
    %c0_4 = arith.constant 0 : index
    %4 = vector.load %arg2[%c0_3, %c0_4] : memref<128x128xbf16, #tpu.memory_space<vmem>>, vector<128x128xbf16>
    %cst_5 = arith.constant dense<0.000000e+00> : vector<128x128xf32>
    %5 = tpu.matmul %3, %4, %cst_5 {dimension_numbers = #tpu.dot_dimension_numbers<[1], [0], [0], [1], [0, 0, 1, 1], [], []>} : vector<128x128xbf16>, vector<128x128xbf16>, vector<128x128xf32> -> vector<128x128xf32>
    %c0_6 = arith.constant 0 : index
    %c0_7 = arith.constant 0 : index
    %6 = vector.load %arg3[%c0_6, %c0_7] : memref<1x128xf32, #tpu.memory_space<vmem>>, vector<1x128xf32>
    %7 = vector.broadcast %6 : vector<1x128xf32> to vector<128x128xf32>
    %8 = arith.addf %5, %7 : vector<128x128xf32>
    %9 = arith.negf %8 : vector<128x128xf32>
    %10 = math.exp %9 : vector<128x128xf32>
    %cst_8 = arith.constant 1.000000e+00 : f32
    %11 = vector.broadcast %cst_8 : f32 to vector<128x128xf32>
    %12 = arith.addf %11, %10 : vector<128x128xf32>
    %13 = arith.divf %11, %12 : vector<128x128xf32>
    %14 = arith.truncf %13 : vector<128x128xf32> to vector<128x128xbf16>
    %c0_9 = arith.constant 0 : index
    %c0_10 = arith.constant 0 : index
    %15 = vector.load %arg4[%c0_9, %c0_10] : memref<128x128xbf16, #tpu.memory_space<vmem>>, vector<128x128xbf16>
    %cst_11 = arith.constant dense<0.000000e+00> : vector<128x128xf32>
    %16 = tpu.matmul %14, %15, %cst_11 {dimension_numbers = #tpu.dot_dimension_numbers<[1], [0], [0], [1], [0, 0, 1, 1], [], []>} : vector<128x128xbf16>, vector<128x128xbf16>, vector<128x128xf32> -> vector<128x128xf32>
    %17 = arith.truncf %16 : vector<128x128xf32> to vector<128x128xbf16>
    %cst_12 = arith.constant dense<0.000000e+00> : vector<128x128xf32>
    %18 = tpu.matmul %0, %17, %cst_12 {dimension_numbers = #tpu.dot_dimension_numbers<[1], [0], [0], [1], [0, 0, 1, 1], [], []>} : vector<128x128xbf16>, vector<128x128xbf16>, vector<128x128xf32> -> vector<128x128xf32>
    %c0_13 = arith.constant 0 : index
    %c0_14 = arith.constant 0 : index
    %19 = vector.load %arg5[%c0_13, %c0_14] : memref<1x128xf32, #tpu.memory_space<vmem>>, vector<1x128xf32>
    %20 = vector.broadcast %19 : vector<1x128xf32> to vector<128x128xf32>
    %21 = arith.addf %18, %20 : vector<128x128xf32>
    %22 = arith.negf %21 : vector<128x128xf32>
    %23 = math.exp %22 : vector<128x128xf32>
    %cst_15 = arith.constant 1.000000e+00 : f32
    %24 = vector.broadcast %cst_15 : f32 to vector<128x128xf32>
    %25 = arith.addf %24, %23 : vector<128x128xf32>
    %26 = arith.divf %24, %25 : vector<128x128xf32>
    %c0_16 = arith.constant 0 : index
    %c0_17 = arith.constant 0 : index
    %27 = vector.load %arg6[%c0_16, %c0_17] : memref<128x128xf32, #tpu.memory_space<vmem>>, vector<128x128xf32>
    tpu.vector_store %arg6[%c0_16, %c0_17], %26 {strides = array<i32>} : memref<128x128xf32, #tpu.memory_space<vmem>>, vector<128x128xf32>,
    %28 = tpu.iota {dimensions = array<i32: 1>} : vector<128x128xi32>
    %c8_i32 = arith.constant 8 : i32
    %29 = vector.broadcast %c8_i32 : i32 to vector<128x128xi32>
    %30 = arith.cmpi slt, %28, %29 : vector<128x128xi32>
    %cst_18 = arith.constant 0.000000e+00 : f32
    %31 = vector.broadcast %cst_18 : f32 to vector<128x128xf32>
    %32 = arith.select %30, %26, %31 : vector<128x128xi1>, vector<128x128xf32>
    %33 = arith.truncf %32 : vector<128x128xf32> to vector<128x128xbf16>
    %cst_19 = arith.constant dense<0.000000e+00> : vector<128x128xf32>
    %34 = tpu.matmul %33, %33, %cst_19 {dimension_numbers = #tpu.dot_dimension_numbers<[1], [1], [0], [0], [0, 0, 1, 0], [], []>} : vector<128x128xbf16>, vector<128x128xbf16>, vector<128x128xf32> -> vector<128x128xf32>
    %35 = arith.negf %34 : vector<128x128xf32>
    %36 = math.exp %35 : vector<128x128xf32>
    %cst_20 = arith.constant 1.000000e+00 : f32
    %37 = vector.broadcast %cst_20 : f32 to vector<128x128xf32>
    %38 = arith.addf %37, %36 : vector<128x128xf32>
    %39 = arith.divf %37, %38 : vector<128x128xf32>
    %c0_21 = arith.constant 0 : index
    %c0_22 = arith.constant 0 : index
    %40 = vector.load %arg7[%c0_21, %c0_22] : memref<128x128xf32, #tpu.memory_space<vmem>>, vector<128x128xf32>
    tpu.vector_store %arg7[%c0_21, %c0_22], %39 {strides = array<i32>} : memref<128x128xf32, #tpu.memory_space<vmem>>, vector<128x128xf32>,
    return
  }
}

</mosaic_0001>

<llo_original>
// kernel: ae_forward.1
$region0: #{ae_forward.1}
  #allocation0 [shape = 'u32[]', space=smem, size = 0x4, offset = 0x4, fixed_abs, tag = 'smem constant byte address 0x4 - core index']
  #allocation1 [shape = 'u32[72,128]{1,0:T(1,128)}', space=vmem, size = 0x9000, scoped, tag = 'internal scratch']
  %s0 = inlined_call_operand.vmem [shape: bf16[128,128], index: 0, kind: input, shape index: {}]
  %s1 = inlined_call_operand.vmem [shape: bf16[128,128], index: 1, kind: input, shape index: {}]
  %s2 = inlined_call_operand.vmem [shape: bf16[128,128], index: 2, kind: input, shape index: {}]
  %s3 = inlined_call_operand.vmem [shape: f32[1,128], index: 3, kind: input, shape index: {}]
  %s4 = inlined_call_operand.vmem [shape: bf16[128,128], index: 4, kind: input, shape index: {}]
  %s5 = inlined_call_operand.vmem [shape: f32[1,128], index: 5, kind: input, shape index: {}]
  %s6 = inlined_call_operand.vmem [shape: f32[128,128], index: 6, kind: output, shape index: {0}]
  %s7 = inlined_call_operand.vmem [shape: f32[128,128], index: 7, kind: output, shape index: {1}]
  %8 = xla_tuple %s6, %s7
  %s9 = sld [smem:[#allocation0]]
  $region42: #{ae_forward.1} parent=0
    _
  %s11 = ssub.s32 1, %s9
  %s12 = scalar_select 0, %s11, %s9
  // Predicated region
  $region2: #{ae_forward.1} parent=0 // pred_check
    _
  $region3: #{ae_forward.1} parent=0 // pred_check_branch
    %14 = sbr.rel (0) target = $region5
  $region4: #{ae_forward.1} parent=0 // pred_region
    _
  $region5: #{ae_forward.1} parent=0 // pred_fallthru
    _
  // Predicated region
  $region6: #{ae_forward.1} parent=0 // pred_check
    _
  $region7: #{ae_forward.1} parent=0 // pred_check_branch
    %16 = sbr.rel (0) target = $region9
  $region8: #{ae_forward.1} parent=0 // pred_region
    _
  $region9: #{ae_forward.1} parent=0 // pred_fallthru
    _
  // Predicated region
  $region10: #{ae_forward.1} parent=0 // pred_check
    _
  $region11: #{ae_forward.1} parent=0 // pred_check_branch
    %18 = sbr.rel (0) target = $region13
  $region12: #{ae_forward.1} parent=0 // pred_region
    _
  $region13: #{ae_forward.1} parent=0 // pred_fallthru
    _
  // Predicated region
  $region14: #{ae_forward.1} parent=0 // pred_check
    _
  $region15: #{ae_forward.1} parent=0 // pred_check_branch
    %20 = sbr.rel (0) target = $region17
  $region16: #{ae_forward.1} parent=0 // pred_region
    _
  $region17: #{ae_forward.1} parent=0 // pred_fallthru
    _
  // Predicated region
  $region18: #{ae_forward.1} parent=0 // pred_check
    _
  $region19: #{ae_forward.1} parent=0 // pred_check_branch
    %22 = sbr.rel (0) target = $region21
  $region20: #{ae_forward.1} parent=0 // pred_region
    _
  $region21: #{ae_forward.1} parent=0 // pred_fallthru
    _
  // Predicated region
  $region22: #{ae_forward.1} parent=0 // pred_check
    _
  $region23: #{ae_forward.1} parent=0 // pred_check_branch
    %24 = sbr.rel (0) target = $region25
  $region24: #{ae_forward.1} parent=0 // pred_region
    _
  $region25: #{ae_forward.1} parent=0 // pred_fallthru
    _
  %v25 = vld [vmem:[%s0] sm:$0xf]
  %v26 = vld [vmem:[%s0 + $0x4] sm:$0xf]
  %v27 = vld [vmem:[%s0 + $0x8] sm:$0xf]
  %v28 = vld [vmem:[%s0 + $0xc] sm:$0xf]
  %v29 = vld [vmem:[%s0 + $0x10] sm:$0xf]
  %v30 = vld [vmem:[%s0 + $0x14] sm:$0xf]
  %v31 = vld [vmem:[%s0 + $0x18] sm:$0xf]
  %v32 = vld [vmem:[%s0 + $0x1c] sm:$0xf]
  %v33 = vld [vmem:[%s0 + $0x20] sm:$0xf]
  %v34 = vld [vmem:[%s0 + $0x24] sm:$0xf]
  %v35 = vld [vmem:[%s0 + $0x28] sm:$0xf]
  %v36 = vld [vmem:[%s0 + $0x2c] sm:$0xf]
  %v37 = vld [vmem:[%s0 + $0x30] sm:$0xf]
  %v38 = vld [vmem:[%s0 + $0x34] sm:$0xf]
  %v39 = vld [vmem:[%s0 + $0x38] sm:$0xf]
  %v40 = vld [vmem:[%s0 + $0x3c] sm:$0xf]
  %v41 = vld [vmem:[%s1] sm:$0xf]
  %v42 = vld [vmem:[%s1 + $0x4] sm:$0xf]
  %v43 = vld [vmem:[%s1 + $0x8] sm:$0xf]
  %v44 = vld [vmem:[%s1 + $0xc] sm:$0xf]
  %v45 = vld [vmem:[%s1 + $0x10] sm:$0xf]
  %v46 = vld [vmem:[%s1 + $0x14] sm:$0xf]
  %v47 = vld [vmem:[%s1 + $0x18] sm:$0xf]
  %v48 = vld [vmem:[%s1 + $0x1c] sm:$0xf]
  %v49 = vld [vmem:[%s1 + $0x20] sm:$0xf]
  %v50 = vld [vmem:[%s1 + $0x24] sm:$0xf]
  %v51 = vld [vmem:[%s1 + $0x28] sm:$0xf]
  %v52 = vld [vmem:[%s1 + $0x2c] sm:$0xf]
  %v53 = vld [vmem:[%s1 + $0x30] sm:$0xf]
  %v54 = vld [vmem:[%s1 + $0x34] sm:$0xf]
  %v55 = vld [vmem:[%s1 + $0x38] sm:$0xf]
  %v56 = vld [vmem:[%s1 + $0x3c] sm:$0xf]
  %v73 = vunpack.c.l.b16 %v25
  %v74 = vunpack.c.l.b16 %v26
  %v75 = vunpack.c.l.b16 %v27
  %v76 = vunpack.c.l.b16 %v28
  %v77 = vunpack.c.l.b16 %v29
  %v78 = vunpack.c.l.b16 %v30
  %v79 = vunpack.c.l.b16 %v31
  %v80 = vunpack.c.l.b16 %v32
  %v81 = vunpack.c.l.b16 %v33
  %v82 = vunpack.c.l.b16 %v34
  %v83 = vunpack.c.l.b16 %v35
  %v84 = vunpack.c.l.b16 %v36
  %v85 = vunpack.c.l.b16 %v37
  %v86 = vunpack.c.l.b16 %v38
  %v87 = vunpack.c.l.b16 %v39
  %v88 = vunpack.c.l.b16 %v40
  %v89 = vpack.c.b16 %v74, %v73
  %v90 = vpack.c.b16 %v76, %v75
  %v91 = vpack.c.b16 %v78, %v77
  %v92 = vpack.c.b16 %v80, %v79
  %v93 = vpack.c.b16 %v82, %v81
  %v94 = vpack.c.b16 %v84, %v83
  %v95 = vpack.c.b16 %v86, %v85
  %v96 = vpack.c.b16 %v88, %v87
  %v121 = vunpack.c.l.b16 %v41
  %v122 = vunpack.c.l.b16 %v42
  %v123 = vunpack.c.l.b16 %v43
  %v124 = vunpack.c.l.b16 %v44
  %v125 = vunpack.c.l.b16 %v45
  %v126 = vunpack.c.l.b16 %v46
  %v127 = vunpack.c.l.b16 %v47
  %v128 = vunpack.c.l.b16 %v48
  %v129 = vunpack.c.l.b16 %v49
  %v130 = vunpack.c.l.b16 %v50
  %v131 = vunpack.c.l.b16 %v51
  %v132 = vunpack.c.l.b16 %v52
  %v133 = vunpack.c.l.b16 %v53
  %v134 = vunpack.c.l.b16 %v54
  %v135 = vunpack.c.l.b16 %v55
  %v136 = vunpack.c.l.b16 %v56
  %v137 = vpack.c.b16 %v122, %v121
  %v138 = vpack.c.b16 %v124, %v123
  %v139 = vpack.c.b16 %v126, %v125
  %v140 = vpack.c.b16 %v128, %v127
  %v141 = vpack.c.b16 %v130, %v129
  %v142 = vpack.c.b16 %v132, %v131
  %v143 = vpack.c.b16 %v134, %v133
  %v144 = vpack.c.b16 %v136, %v135
  %153 = vmatpush.bf16.msra.mxu0 %v144
  %154 = vmatpush.bf16.msra.mxu0 %v143
  %155 = vmatpush.bf16.msra.mxu0 %v142
  %156 = vmatpush.bf16.msra.mxu0 %v141
  %157 = vmatpush.bf16.msra.mxu0 %v140
  %158 = vmatpush.bf16.msra.mxu0 %v139
  %159 = vmatpush.bf16.msra.mxu0 %v138
  %160 = vmatpush.bf16.msra.mxu0 %v137
  %161 = vmatmul.bf16.gmra.mxu0 %v89
  %v162 = vpop.f32.mrf.mxu0
  %v163 = vadd.f32 0.0, %v162
  %v164 = vpop.f32.mrf.mxu0
  %v165 = vadd.f32 0.0, %v164
  %166 = vmatmul.bf16.gmra.mxu0 %v90
  %v167 = vpop.f32.mrf.mxu0
  %v168 = vadd.f32 0.0, %v167
  %v169 = vpop.f32.mrf.mxu0
  %v170 = vadd.f32 0.0, %v169
  %171 = vmatmul.bf16.gmra.mxu0 %v91
  %v172 = vpop.f32.mrf.mxu0
  %v173 = vadd.f32 0.0, %v172
  %v174 = vpop.f32.mrf.mxu0
  %v175 = vadd.f32 0.0, %v174
  %176 = vmatmul.bf16.gmra.mxu0 %v92
  %v177 = vpop.f32.mrf.mxu0
  %v178 = vadd.f32 0.0, %v177
  %v179 = vpop.f32.mrf.mxu0
  %v180 = vadd.f32 0.0, %v179
  %181 = vmatmul.bf16.gmra.mxu0 %v93
  %v182 = vpop.f32.mrf.mxu0
  %v183 = vadd.f32 0.0, %v182
  %v184 = vpop.f32.mrf.mxu0
  %v185 = vadd.f32 0.0, %v184
  %186 = vmatmul.bf16.gmra.mxu0 %v94
  %v187 = vpop.f32.mrf.mxu0
  %v188 = vadd.f32 0.0, %v187
  %v189 = vpop.f32.mrf.mxu0
  %v190 = vadd.f32 0.0, %v189
  %191 = vmatmul.bf16.gmra.mxu0 %v95
  %v192 = vpop.f32.mrf.mxu0
  %v193 = vadd.f32 0.0, %v192
  %v194 = vpop.f32.mrf.mxu0
  %v195 = vadd.f32 0.0, %v194
  %196 = vmatmul.bf16.gmra.mxu0 %v96
  %v197 = vpop.f32.mrf.mxu0
  %v198 = vadd.f32 0.0, %v197
  %v199 = vpop.f32.mrf.mxu0
  %v200 = vadd.f32 0.0, %v199
  %201 = vdwg.mxu0
  %v202 = vpack.c.bf16 %v165, %v163
  %v203 = vpack.c.bf16 %v170, %v168
  %v204 = vpack.c.bf16 %v175, %v173
  %v205 = vpack.c.bf16 %v180, %v178
  %v206 = vpack.c.bf16 %v185, %v183
  %v207 = vpack.c.bf16 %v190, %v188
  %v208 = vpack.c.bf16 %v195, %v193
  %v209 = vpack.c.bf16 %v200, %v198
  %v210 = vld [vmem:[%s2] sm:$0xf]
  %v211 = vld [vmem:[%s2 + $0x4] sm:$0xf]
  %v212 = vld [vmem:[%s2 + $0x8] sm:$0xf]
  %v213 = vld [vmem:[%s2 + $0xc] sm:$0xf]
  %v214 = vld [vmem:[%s2 + $0x10] sm:$0xf]
  %v215 = vld [vmem:[%s2 + $0x14] sm:$0xf]
  %v216 = vld [vmem:[%s2 + $0x18] sm:$0xf]
  %v217 = vld [vmem:[%s2 + $0x1c] sm:$0xf]
  %v218 = vld [vmem:[%s2 + $0x20] sm:$0xf]
  %v219 = vld [vmem:[%s2 + $0x24] sm:$0xf]
  %v220 = vld [vmem:[%s2 + $0x28] sm:$0xf]
  %v221 = vld [vmem:[%s2 + $0x2c] sm:$0xf]
  %v222 = vld [vmem:[%s2 + $0x30] sm:$0xf]
  %v223 = vld [vmem:[%s2 + $0x34] sm:$0xf]
  %v224 = vld [vmem:[%s2 + $0x38] sm:$0xf]
  %v225 = vld [vmem:[%s2 + $0x3c] sm:$0xf]
  %v226 = vld [vmem:[%s3] sm:$0x1]
  %v228 = vperm.slane %v226, 0
  %v246 = vunpack.c.l.b16 %v210
  %v247 = vunpack.c.l.b16 %v211
  %v248 = vunpack.c.l.b16 %v212
  %v249 = vunpack.c.l.b16 %v213
  %v250 = vunpack.c.l.b16 %v214
  %v251 = vunpack.c.l.b16 %v215
  %v252 = vunpack.c.l.b16 %v216
  %v253 = vunpack.c.l.b16 %v217
  %v254 = vunpack.c.l.b16 %v218
  %v255 = vunpack.c.l.b16 %v219
  %v256 = vunpack.c.l.b16 %v220
  %v257 = vunpack.c.l.b16 %v221
  %v258 = vunpack.c.l.b16 %v222
  %v259 = vunpack.c.l.b16 %v223
  %v260 = vunpack.c.l.b16 %v224
  %v261 = vunpack.c.l.b16 %v225
  %v262 = vpack.c.b16 %v247, %v246
  %v263 = vpack.c.b16 %v249, %v248
  %v264 = vpack.c.b16 %v251, %v250
  %v265 = vpack.c.b16 %v253, %v252
  %v266 = vpack.c.b16 %v255, %v254
  %v267 = vpack.c.b16 %v257, %v256
  %v268 = vpack.c.b16 %v259, %v258
  %v269 = vpack.c.b16 %v261, %v260
  %278 = vmatpush.bf16.msra.mxu0 %v269
  %279 = vmatpush.bf16.msra.mxu0 %v268
  %280 = vmatpush.bf16.msra.mxu0 %v267
  %281 = vmatpush.bf16.msra.mxu0 %v266
  %282 = vmatpush.bf16.msra.mxu0 %v265
  %283 = vmatpush.bf16.msra.mxu0 %v264
  %284 = vmatpush.bf16.msra.mxu0 %v263
  %285 = vmatpush.bf16.msra.mxu0 %v262
  %286 = vmatmul.bf16.gmra.mxu0 %v202
  %v287 = vpop.f32.mrf.mxu0
  %v288 = vadd.f32 %v228, %v287
  %v289 = vpop.f32.mrf.mxu0
  %v290 = vadd.f32 %v228, %v289
  %291 = vmatmul.bf16.gmra.mxu0 %v203
  %v292 = vpop.f32.mrf.mxu0
  %v293 = vadd.f32 %v228, %v292
  %v294 = vpop.f32.mrf.mxu0
  %v295 = vadd.f32 %v228, %v294
  %296 = vmatmul.bf16.gmra.mxu0 %v204
  %v297 = vpop.f32.mrf.mxu0
  %v298 = vadd.f32 %v228, %v297
  %v299 = vpop.f32.mrf.mxu0
  %v300 = vadd.f32 %v228, %v299
  %301 = vmatmul.bf16.gmra.mxu0 %v205
  %v302 = vpop.f32.mrf.mxu0
  %v303 = vadd.f32 %v228, %v302
  %v304 = vpop.f32.mrf.mxu0
  %v305 = vadd.f32 %v228, %v304
  %306 = vmatmul.bf16.gmra.mxu0 %v206
  %v307 = vpop.f32.mrf.mxu0
  %v308 = vadd.f32 %v228, %v307
  %v309 = vpop.f32.mrf.mxu0
  %v310 = vadd.f32 %v228, %v309
  %311 = vmatmul.bf16.gmra.mxu0 %v207
  %v312 = vpop.f32.mrf.mxu0
  %v313 = vadd.f32 %v228, %v312
  %v314 = vpop.f32.mrf.mxu0
  %v315 = vadd.f32 %v228, %v314
  %316 = vmatmul.bf16.gmra.mxu0 %v208
  %v317 = vpop.f32.mrf.mxu0
  %v318 = vadd.f32 %v228, %v317
  %v319 = vpop.f32.mrf.mxu0
  %v320 = vadd.f32 %v228, %v319
  %321 = vmatmul.bf16.gmra.mxu0 %v209
  %v322 = vpop.f32.mrf.mxu0
  %v323 = vadd.f32 %v228, %v322
  %v324 = vpop.f32.mrf.mxu0
  %v325 = vadd.f32 %v228, %v324
  %326 = vdwg.mxu0
  %v327 = vxor.u32 %v288, 2147483648
  %v328 = vxor.u32 %v290, 2147483648
  %v329 = vxor.u32 %v293, 2147483648
  %v330 = vxor.u32 %v295, 2147483648
  %v331 = vxor.u32 %v298, 2147483648
  %v332 = vxor.u32 %v300, 2147483648
  %v333 = vxor.u32 %v303, 2147483648
  %v334 = vxor.u32 %v305, 2147483648
  %v335 = vxor.u32 %v308, 2147483648
  %v336 = vxor.u32 %v310, 2147483648
  %v337 = vxor.u32 %v313, 2147483648
  %v338 = vxor.u32 %v315, 2147483648
  %v339 = vxor.u32 %v318, 2147483648
  %v340 = vxor.u32 %v320, 2147483648
  %v341 = vxor.u32 %v323, 2147483648
  %v342 = vxor.u32 %v325, 2147483648
  %v343 = vmul.f32 %v327, 1.442695
  %v344 = vpow.pop %v343
  %v345 = vmul.f32 %v328, 1.442695
  %v346 = vpow.pop %v345
  %v347 = vmul.f32 %v329, 1.442695
  %v348 = vpow.pop %v347
  %v349 = vmul.f32 %v330, 1.442695
  %v350 = vpow.pop %v349
  %v351 = vmul.f32 %v331, 1.442695
  %v352 = vpow.pop %v351
  %v353 = vmul.f32 %v332, 1.442695
  %v354 = vpow.pop %v353
  %v355 = vmul.f32 %v333, 1.442695
  %v356 = vpow.pop %v355
  %v357 = vmul.f32 %v334, 1.442695
  %v358 = vpow.pop %v357
  %v359 = vmul.f32 %v335, 1.442695
  %v360 = vpow.pop %v359
  %v361 = vmul.f32 %v336, 1.442695
  %v362 = vpow.pop %v361
  %v363 = vmul.f32 %v337, 1.442695
  %v364 = vpow.pop %v363
  %v365 = vmul.f32 %v338, 1.442695
  %v366 = vpow.pop %v365
  %v367 = vmul.f32 %v339, 1.442695
  %v368 = vpow.pop %v367
  %v369 = vmul.f32 %v340, 1.442695
  %v370 = vpow.pop %v369
  %v371 = vmul.f32 %v341, 1.442695
  %v372 = vpow.pop %v371
  %v373 = vmul.f32 %v342, 1.442695
  %v374 = vpow.pop %v373
  %v375 = vadd.f32 %v344, 1.0
  %v376 = vadd.f32 %v346, 1.0
  %v377 = vadd.f32 %v348, 1.0
  %v378 = vadd.f32 %v350, 1.0
  %v379 = vadd.f32 %v352, 1.0
  %v380 = vadd.f32 %v354, 1.0
  %v381 = vadd.f32 %v356, 1.0
  %v382 = vadd.f32 %v358, 1.0
  %v383 = vadd.f32 %v360, 1.0
  %v384 = vadd.f32 %v362, 1.0
  %v385 = vadd.f32 %v364, 1.0
  %v386 = vadd.f32 %v366, 1.0
  %v387 = vadd.f32 %v368, 1.0
  %v388 = vadd.f32 %v370, 1.0
  %v389 = vadd.f32 %v372, 1.0
  %v390 = vadd.f32 %v374, 1.0
  %v391 = vrcp.pop %v375
  %v392 = vmul.f32 %v375, %v391
  %v393 = vsub.f32 1.0, %v392
  %v394 = vmul.f32 %v391, %v393
  %v395 = vadd.f32 %v391, %v394
  %vm396 = vweird.f32 %v375
  %vm397 = vweird.f32 %v391
  %vm398 = vmor %vm396, %vm397
  %v399 = vsel %vm398, %v391, %v395
  %v400 = vand.u32 2147483647, %v375
  %vm401 = vcmp.eq.f32.partialorder %v400, 8.507059e+37
  %v402 = vand.u32 %v375, 2147483648
  %v403 = vor.u32 1.1754944e-38, %v402
  %v404 = vsel %vm401, %v403, %v399
  %v405 = vmul.f32 1.0, %v404
  %v406 = vrcp.pop %v376
  %v407 = vmul.f32 %v376, %v406
  %v408 = vsub.f32 1.0, %v407
  %v409 = vmul.f32 %v406, %v408
  %v410 = vadd.f32 %v406, %v409
  %vm411 = vweird.f32 %v376
  %vm412 = vweird.f32 %v406
  %vm413 = vmor %vm411, %vm412
  %v414 = vsel %vm413, %v406, %v410
  %v415 = vand.u32 2147483647, %v376
  %vm416 = vcmp.eq.f32.partialorder %v415, 8.507059e+37
  %v417 = vand.u32 %v376, 2147483648
  %v418 = vor.u32 1.1754944e-38, %v417
  %v419 = vsel %vm416, %v418, %v414
  %v420 = vmul.f32 1.0, %v419
  %v421 = vrcp.pop %v377
  %v422 = vmul.f32 %v377, %v421
  %v423 = vsub.f32 1.0, %v422
  %v424 = vmul.f32 %v421, %v423
  %v425 = vadd.f32 %v421, %v424
  %vm426 = vweird.f32 %v377
  %vm427 = vweird.f32 %v421
  %vm428 = vmor %vm426, %vm427
  %v429 = vsel %vm428, %v421, %v425
  %v430 = vand.u32 2147483647, %v377
  %vm431 = vcmp.eq.f32.partialorder %v430, 8.507059e+37
  %v432 = vand.u32 %v377, 2147483648
  %v433 = vor.u32 1.1754944e-38, %v432
  %v434 = vsel %vm431, %v433, %v429
  %v435 = vmul.f32 1.0, %v434
  %v436 = vrcp.pop %v378
  %v437 = vmul.f32 %v378, %v436
  %v438 = vsub.f32 1.0, %v437
  %v439 = vmul.f32 %v436, %v438
  %v440 = vadd.f32 %v436, %v439
  %vm441 = vweird.f32 %v378
  %vm442 = vweird.f32 %v436
  %vm443 = vmor %vm441, %vm442
  %v444 = vsel %vm443, %v436, %v440
  %v445 = vand.u32 2147483647, %v378
  %vm446 = vcmp.eq.f32.partialorder %v445, 8.507059e+37
  %v447 = vand.u32 %v378, 2147483648
  %v448 = vor.u32 1.1754944e-38, %v447
  %v449 = vsel %vm446, %v448, %v444
  %v450 = vmul.f32 1.0, %v449
  %v451 = vrcp.pop %v379
  %v452 = vmul.f32 %v379, %v451
  %v453 = vsub.f32 1.0, %v452
  %v454 = vmul.f32 %v451, %v453
  %v455 = vadd.f32 %v451, %v454
  %vm456 = vweird.f32 %v379
  %vm457 = vweird.f32 %v451
  %vm458 = vmor %vm456, %vm457
  %v459 = vsel %vm458, %v451, %v455
  %v460 = vand.u32 2147483647, %v379
  %vm461 = vcmp.eq.f32.partialorder %v460, 8.507059e+37
  %v462 = vand.u32 %v379, 2147483648
  %v463 = vor.u32 1.1754944e-38, %v462
  %v464 = vsel %vm461, %v463, %v459
  %v465 = vmul.f32 1.0, %v464
  %v466 = vrcp.pop %v380
  %v467 = vmul.f32 %v380, %v466
  %v468 = vsub.f32 1.0, %v467
  %v469 = vmul.f32 %v466, %v468
  %v470 = vadd.f32 %v466, %v469
  %vm471 = vweird.f32 %v380
  %vm472 = vweird.f32 %v466
  %vm473 = vmor %vm471, %vm472
  %v474 = vsel %vm473, %v466, %v470
  %v475 = vand.u32 2147483647, %v380
  %vm476 = vcmp.eq.f32.partialorder %v475, 8.507059e+37
  %v477 = vand.u32 %v380, 2147483648
  %v478 = vor.u32 1.1754944e-38, %v477
  %v479 = vsel %vm476, %v478, %v474
  %v480 = vmul.f32 1.0, %v479
  %v481 = vrcp.pop %v381
  %v482 = vmul.f32 %v381, %v481
  %v483 = vsub.f32 1.0, %v482
  %v484 = vmul.f32 %v481, %v483
  %v485 = vadd.f32 %v481, %v484
  %vm486 = vweird.f32 %v381
  %vm487 = vweird.f32 %v481
  %vm488 = vmor %vm486, %vm487
  %v489 = vsel %vm488, %v481, %v485
  %v490 = vand.u32 2147483647, %v381
  %vm491 = vcmp.eq.f32.partialorder %v490, 8.507059e+37
  %v492 = vand.u32 %v381, 2147483648
  %v493 = vor.u32 1.1754944e-38, %v492
  %v494 = vsel %vm491, %v493, %v489
  %v495 = vmul.f32 1.0, %v494
  %v496 = vrcp.pop %v382
  %v497 = vmul.f32 %v382, %v496
  %v498 = vsub.f32 1.0, %v497
  %v499 = vmul.f32 %v496, %v498
  %v500 = vadd.f32 %v496, %v499
  %vm501 = vweird.f32 %v382
  %vm502 = vweird.f32 %v496
  %vm503 = vmor %vm501, %vm502
  %v504 = vsel %vm503, %v496, %v500
  %v505 = vand.u32 2147483647, %v382
  %vm506 = vcmp.eq.f32.partialorder %v505, 8.507059e+37
  %v507 = vand.u32 %v382, 2147483648
  %v508 = vor.u32 1.1754944e-38, %v507
  %v509 = vsel %vm506, %v508, %v504
  %v510 = vmul.f32 1.0, %v509
  %v511 = vrcp.pop %v383
  %v512 = vmul.f32 %v383, %v511
  %v513 = vsub.f32 1.0, %v512
  %v514 = vmul.f32 %v511, %v513
  %v515 = vadd.f32 %v511, %v514
  %vm516 = vweird.f32 %v383
  %vm517 = vweird.f32 %v511
  %vm518 = vmor %vm516, %vm517
  %v519 = vsel %vm518, %v511, %v515
  %v520 = vand.u32 2147483647, %v383
  %vm521 = vcmp.eq.f32.partialorder %v520, 8.507059e+37
  %v522 = vand.u32 %v383, 2147483648
  %v523 = vor.u32 1.1754944e-38, %v522
  %v524 = vsel %vm521, %v523, %v519
  %v525 = vmul.f32 1.0, %v524
  %v526 = vrcp.pop %v384
  %v527 = vmul.f32 %v384, %v526
  %v528 = vsub.f32 1.0, %v527
  %v529 = vmul.f32 %v526, %v528
  %v530 = vadd.f32 %v526, %v529
  %vm531 = vweird.f32 %v384
  %vm532 = vweird.f32 %v526
  %vm533 = vmor %vm531, %vm532
  %v534 = vsel %vm533, %v526, %v530
  %v535 = vand.u32 2147483647, %v384
  %vm536 = vcmp.eq.f32.partialorder %v535, 8.507059e+37
  %v537 = vand.u32 %v384, 2147483648
  %v538 = vor.u32 1.1754944e-38, %v537
  %v539 = vsel %vm536, %v538, %v534
  %v540 = vmul.f32 1.0, %v539
  %v541 = vrcp.pop %v385
  %v542 = vmul.f32 %v385, %v541
  %v543 = vsub.f32 1.0, %v542
  %v544 = vmul.f32 %v541, %v543
  %v545 = vadd.f32 %v541, %v544
  %vm546 = vweird.f32 %v385
  %vm547 = vweird.f32 %v541
  %vm548 = vmor %vm546, %vm547
  %v549 = vsel %vm548, %v541, %v545
  %v550 = vand.u32 2147483647, %v385
  %vm551 = vcmp.eq.f32.partialorder %v550, 8.507059e+37
  %v552 = vand.u32 %v385, 2147483648
  %v553 = vor.u32 1.1754944e-38, %v552
  %v554 = vsel %vm551, %v553, %v549
  %v555 = vmul.f32 1.0, %v554
  %v556 = vrcp.pop %v386
  %v557 = vmul.f32 %v386, %v556
  %v558 = vsub.f32 1.0, %v557
  %v559 = vmul.f32 %v556, %v558
  %v560 = vadd.f32 %v556, %v559
  %vm561 = vweird.f32 %v386
  %vm562 = vweird.f32 %v556
  %vm563 = vmor %vm561, %vm562
  %v564 = vsel %vm563, %v556, %v560
  %v565 = vand.u32 2147483647, %v386
  %vm566 = vcmp.eq.f32.partialorder %v565, 8.507059e+37
  %v567 = vand.u32 %v386, 2147483648
  %v568 = vor.u32 1.1754944e-38, %v567
  %v569 = vsel %vm566, %v568, %v564
  %v570 = vmul.f32 1.0, %v569
  %v571 = vrcp.pop %v387
  %v572 = vmul.f32 %v387, %v571
  %v573 = vsub.f32 1.0, %v572
  %v574 = vmul.f32 %v571, %v573
  %v575 = vadd.f32 %v571, %v574
  %vm576 = vweird.f32 %v387
  %vm577 = vweird.f32 %v571
  %vm578 = vmor %vm576, %vm577
  %v579 = vsel %vm578, %v571, %v575
  %v580 = vand.u32 2147483647, %v387
  %vm581 = vcmp.eq.f32.partialorder %v580, 8.507059e+37
  %v582 = vand.u32 %v387, 2147483648
  %v583 = vor.u32 1.1754944e-38, %v582
  %v584 = vsel %vm581, %v583, %v579
  %v585 = vmul.f32 1.0, %v584
  %v586 = vrcp.pop %v388
  %v587 = vmul.f32 %v388, %v586
  %v588 = vsub.f32 1.0, %v587
  %v589 = vmul.f32 %v586, %v588
  %v590 = vadd.f32 %v586, %v589
  %vm591 = vweird.f32 %v388
  %vm592 = vweird.f32 %v586
  %vm593 = vmor %vm591, %vm592
  %v594 = vsel %vm593, %v586, %v590
  %v595 = vand.u32 2147483647, %v388
  %vm596 = vcmp.eq.f32.partialorder %v595, 8.507059e+37
  %v597 = vand.u32 %v388, 2147483648
  %v598 = vor.u32 1.1754944e-38, %v597
  %v599 = vsel %vm596, %v598, %v594
  %v600 = vmul.f32 1.0, %v599
  %v601 = vrcp.pop %v389
  %v602 = vmul.f32 %v389, %v601
  %v603 = vsub.f32 1.0, %v602
  %v604 = vmul.f32 %v601, %v603
  %v605 = vadd.f32 %v601, %v604
  %vm606 = vweird.f32 %v389
  %vm607 = vweird.f32 %v601
  %vm608 = vmor %vm606, %vm607
  %v609 = vsel %vm608, %v601, %v605
  %v610 = vand.u32 2147483647, %v389
  %vm611 = vcmp.eq.f32.partialorder %v610, 8.507059e+37
  %v612 = vand.u32 %v389, 2147483648
  %v613 = vor.u32 1.1754944e-38, %v612
  %v614 = vsel %vm611, %v613, %v609
  %v615 = vmul.f32 1.0, %v614
  %v616 = vrcp.pop %v390
  %v617 = vmul.f32 %v390, %v616
  %v618 = vsub.f32 1.0, %v617
  %v619 = vmul.f32 %v616, %v618
  %v620 = vadd.f32 %v616, %v619
  %vm621 = vweird.f32 %v390
  %vm622 = vweird.f32 %v616
  %vm623 = vmor %vm621, %vm622
  %v624 = vsel %vm623, %v616, %v620
  %v625 = vand.u32 2147483647, %v390
  %vm626 = vcmp.eq.f32.partialorder %v625, 8.507059e+37
  %v627 = vand.u32 %v390, 2147483648
  %v628 = vor.u32 1.1754944e-38, %v627
  %v629 = vsel %vm626, %v628, %v624
  %v630 = vmul.f32 1.0, %v629
  %v631 = vpack.c.bf16 %v420, %v405
  %v632 = vpack.c.bf16 %v450, %v435
  %v633 = vpack.c.bf16 %v480, %v465
  %v634 = vpack.c.bf16 %v510, %v495
  %v635 = vpack.c.bf16 %v540, %v525
  %v636 = vpack.c.bf16 %v570, %v555
  %v637 = vpack.c.bf16 %v600, %v585
  %v638 = vpack.c.bf16 %v630, %v615
  %v639 = vld [vmem:[%s4] sm:$0xf]
  %v640 = vld [vmem:[%s4 + $0x4] sm:$0xf]
  %v641 = vld [vmem:[%s4 + $0x8] sm:$0xf]
  %v642 = vld [vmem:[%s4 + $0xc] sm:$0xf]
  %v643 = vld [vmem:[%s4 + $0x10] sm:$0xf]
  %v644 = vld [vmem:[%s4 + $0x14] sm:$0xf]
  %v645 = vld [vmem:[%s4 + $0x18] sm:$0xf]
  %v646 = vld [vmem:[%s4 + $0x1c] sm:$0xf]
  %v647 = vld [vmem:[%s4 + $0x20] sm:$0xf]
  %v648 = vld [vmem:[%s4 + $0x24] sm:$0xf]
  %v649 = vld [vmem:[%s4 + $0x28] sm:$0xf]
  %v650 = vld [vmem:[%s4 + $0x2c] sm:$0xf]
  %v651 = vld [vmem:[%s4 + $0x30] sm:$0xf]
  %v652 = vld [vmem:[%s4 + $0x34] sm:$0xf]
  %v653 = vld [vmem:[%s4 + $0x38] sm:$0xf]
  %v654 = vld [vmem:[%s4 + $0x3c] sm:$0xf]
  %v671 = vunpack.c.l.b16 %v639
  %v672 = vunpack.c.l.b16 %v640
  %v673 = vunpack.c.l.b16 %v641
  %v674 = vunpack.c.l.b16 %v642
  %v675 = vunpack.c.l.b16 %v643
  %v676 = vunpack.c.l.b16 %v644
  %v677 = vunpack.c.l.b16 %v645
  %v678 = vunpack.c.l.b16 %v646
  %v679 = vunpack.c.l.b16 %v647
  %v680 = vunpack.c.l.b16 %v648
  %v681 = vunpack.c.l.b16 %v649
  %v682 = vunpack.c.l.b16 %v650
  %v683 = vunpack.c.l.b16 %v651
  %v684 = vunpack.c.l.b16 %v652
  %v685 = vunpack.c.l.b16 %v653
  %v686 = vunpack.c.l.b16 %v654
  %v687 = vpack.c.b16 %v672, %v671
  %v688 = vpack.c.b16 %v674, %v673
  %v689 = vpack.c.b16 %v676, %v675
  %v690 = vpack.c.b16 %v678, %v677
  %v691 = vpack.c.b16 %v680, %v679
  %v692 = vpack.c.b16 %v682, %v681
  %v693 = vpack.c.b16 %v684, %v683
  %v694 = vpack.c.b16 %v686, %v685
  %703 = vmatpush.bf16.msra.mxu0 %v694
  %704 = vmatpush.bf16.msra.mxu0 %v693
  %705 = vmatpush.bf16.msra.mxu0 %v692
  %706 = vmatpush.bf16.msra.mxu0 %v691
  %707 = vmatpush.bf16.msra.mxu0 %v690
  %708 = vmatpush.bf16.msra.mxu0 %v689
  %709 = vmatpush.bf16.msra.mxu0 %v688
  %710 = vmatpush.bf16.msra.mxu0 %v687
  %711 = vmatmul.bf16.gmra.mxu0 %v631
  %v712 = vpop.f32.mrf.mxu0
  %v713 = vadd.f32 0.0, %v712
  %v714 = vpop.f32.mrf.mxu0
  %v715 = vadd.f32 0.0, %v714
  %716 = vmatmul.bf16.gmra.mxu0 %v632
  %v717 = vpop.f32.mrf.mxu0
  %v718 = vadd.f32 0.0, %v717
  %v719 = vpop.f32.mrf.mxu0
  %v720 = vadd.f32 0.0, %v719
  %721 = vmatmul.bf16.gmra.mxu0 %v633
  %v722 = vpop.f32.mrf.mxu0
  %v723 = vadd.f32 0.0, %v722
  %v724 = vpop.f32.mrf.mxu0
  %v725 = vadd.f32 0.0, %v724
  %726 = vmatmul.bf16.gmra.mxu0 %v634
  %v727 = vpop.f32.mrf.mxu0
  %v728 = vadd.f32 0.0, %v727
  %v729 = vpop.f32.mrf.mxu0
  %v730 = vadd.f32 0.0, %v729
  %731 = vmatmul.bf16.gmra.mxu0 %v635
  %v732 = vpop.f32.mrf.mxu0
  %v733 = vadd.f32 0.0, %v732
  %v734 = vpop.f32.mrf.mxu0
  %v735 = vadd.f32 0.0, %v734
  %736 = vmatmul.bf16.gmra.mxu0 %v636
  %v737 = vpop.f32.mrf.mxu0
  %v738 = vadd.f32 0.0, %v737
  %v739 = vpop.f32.mrf.mxu0
  %v740 = vadd.f32 0.0, %v739
  %741 = vmatmul.bf16.gmra.mxu0 %v637
  %v742 = vpop.f32.mrf.mxu0
  %v743 = vadd.f32 0.0, %v742
  %v744 = vpop.f32.mrf.mxu0
  %v745 = vadd.f32 0.0, %v744
  %746 = vmatmul.bf16.gmra.mxu0 %v638
  %v747 = vpop.f32.mrf.mxu0
  %v748 = vadd.f32 0.0, %v747
  %v749 = vpop.f32.mrf.mxu0
  %v750 = vadd.f32 0.0, %v749
  %751 = vdwg.mxu0
  %v752 = vpack.c.bf16 %v715, %v713
  %v753 = vpack.c.bf16 %v720, %v718
  %v754 = vpack.c.bf16 %v725, %v723
  %v755 = vpack.c.bf16 %v730, %v728
  %v756 = vpack.c.bf16 %v735, %v733
  %v757 = vpack.c.bf16 %v740, %v738
  %v758 = vpack.c.bf16 %v745, %v743
  %v759 = vpack.c.bf16 %v750, %v748
  %v760 = vld [vmem:[%s5] sm:$0x1]
  %v762 = vperm.slane %v760, 0
  %764 = vmatpush.bf16.msra.mxu0 %v759
  %765 = vmatpush.bf16.msra.mxu0 %v758
  %766 = vmatpush.bf16.msra.mxu0 %v757
  %767 = vmatpush.bf16.msra.mxu0 %v756
  %768 = vmatpush.bf16.msra.mxu0 %v755
  %769 = vmatpush.bf16.msra.mxu0 %v754
  %770 = vmatpush.bf16.msra.mxu0 %v753
  %771 = vmatpush.bf16.msra.mxu0 %v752
  %772 = vmatmul.bf16.gmra.mxu0 %v89
  %v773 = vpop.f32.mrf.mxu0
  %v774 = vadd.f32 %v762, %v773
  %v775 = vpop.f32.mrf.mxu0
  %v776 = vadd.f32 %v762, %v775
  %777 = vmatmul.bf16.gmra.mxu0 %v90
  %v778 = vpop.f32.mrf.mxu0
  %v779 = vadd.f32 %v762, %v778
  %v780 = vpop.f32.mrf.mxu0
  %v781 = vadd.f32 %v762, %v780
  %782 = vmatmul.bf16.gmra.mxu0 %v91
  %v783 = vpop.f32.mrf.mxu0
  %v784 = vadd.f32 %v762, %v783
  %v785 = vpop.f32.mrf.mxu0
  %v786 = vadd.f32 %v762, %v785
  %787 = vmatmul.bf16.gmra.mxu0 %v92
  %v788 = vpop.f32.mrf.mxu0
  %v789 = vadd.f32 %v762, %v788
  %v790 = vpop.f32.mrf.mxu0
  %v791 = vadd.f32 %v762, %v790
  %792 = vmatmul.bf16.gmra.mxu0 %v93
  %v793 = vpop.f32.mrf.mxu0
  %v794 = vadd.f32 %v762, %v793
  %v795 = vpop.f32.mrf.mxu0
  %v796 = vadd.f32 %v762, %v795
  %797 = vmatmul.bf16.gmra.mxu0 %v94
  %v798 = vpop.f32.mrf.mxu0
  %v799 = vadd.f32 %v762, %v798
  %v800 = vpop.f32.mrf.mxu0
  %v801 = vadd.f32 %v762, %v800
  %802 = vmatmul.bf16.gmra.mxu0 %v95
  %v803 = vpop.f32.mrf.mxu0
  %v804 = vadd.f32 %v762, %v803
  %v805 = vpop.f32.mrf.mxu0
  %v806 = vadd.f32 %v762, %v805
  %807 = vmatmul.bf16.gmra.mxu0 %v96
  %v808 = vpop.f32.mrf.mxu0
  %v809 = vadd.f32 %v762, %v808
  %v810 = vpop.f32.mrf.mxu0
  %v811 = vadd.f32 %v762, %v810
  %812 = vdwg.mxu0
  %v813 = vxor.u32 %v774, 2147483648
  %v814 = vxor.u32 %v776, 2147483648
  %v815 = vxor.u32 %v779, 2147483648
  %v816 = vxor.u32 %v781, 2147483648
  %v817 = vxor.u32 %v784, 2147483648
  %v818 = vxor.u32 %v786, 2147483648
  %v819 = vxor.u32 %v789, 2147483648
  %v820 = vxor.u32 %v791, 2147483648
  %v821 = vxor.u32 %v794, 2147483648
  %v822 = vxor.u32 %v796, 2147483648
  %v823 = vxor.u32 %v799, 2147483648
  %v824 = vxor.u32 %v801, 2147483648
  %v825 = vxor.u32 %v804, 2147483648
  %v826 = vxor.u32 %v806, 2147483648
  %v827 = vxor.u32 %v809, 2147483648
  %v828 = vxor.u32 %v811, 2147483648
  %v829 = vmul.f32 %v813, 1.442695
  %v830 = vpow.pop %v829
  %v831 = vmul.f32 %v814, 1.442695
  %v832 = vpow.pop %v831
  %v833 = vmul.f32 %v815, 1.442695
  %v834 = vpow.pop %v833
  %v835 = vmul.f32 %v816, 1.442695
  %v836 = vpow.pop %v835
  %v837 = vmul.f32 %v817, 1.442695
  %v838 = vpow.pop %v837
  %v839 = vmul.f32 %v818, 1.442695
  %v840 = vpow.pop %v839
  %v841 = vmul.f32 %v819, 1.442695
  %v842 = vpow.pop %v841
  %v843 = vmul.f32 %v820, 1.442695
  %v844 = vpow.pop %v843
  %v845 = vmul.f32 %v821, 1.442695
  %v846 = vpow.pop %v845
  %v847 = vmul.f32 %v822, 1.442695
  %v848 = vpow.pop %v847
  %v849 = vmul.f32 %v823, 1.442695
  %v850 = vpow.pop %v849
  %v851 = vmul.f32 %v824, 1.442695
  %v852 = vpow.pop %v851
  %v853 = vmul.f32 %v825, 1.442695
  %v854 = vpow.pop %v853
  %v855 = vmul.f32 %v826, 1.442695
  %v856 = vpow.pop %v855
  %v857 = vmul.f32 %v827, 1.442695
  %v858 = vpow.pop %v857
  %v859 = vmul.f32 %v828, 1.442695
  %v860 = vpow.pop %v859
  %v861 = vadd.f32 %v830, 1.0
  %v862 = vadd.f32 %v832, 1.0
  %v863 = vadd.f32 %v834, 1.0
  %v864 = vadd.f32 %v836, 1.0
  %v865 = vadd.f32 %v838, 1.0
  %v866 = vadd.f32 %v840, 1.0
  %v867 = vadd.f32 %v842, 1.0
  %v868 = vadd.f32 %v844, 1.0
  %v869 = vadd.f32 %v846, 1.0
  %v870 = vadd.f32 %v848, 1.0
  %v871 = vadd.f32 %v850, 1.0
  %v872 = vadd.f32 %v852, 1.0
  %v873 = vadd.f32 %v854, 1.0
  %v874 = vadd.f32 %v856, 1.0
  %v875 = vadd.f32 %v858, 1.0
  %v876 = vadd.f32 %v860, 1.0
  %v877 = vrcp.pop %v861
  %v878 = vmul.f32 %v861, %v877
  %v879 = vsub.f32 1.0, %v878
  %v880 = vmul.f32 %v877, %v879
  %v881 = vadd.f32 %v877, %v880
  %vm882 = vweird.f32 %v861
  %vm883 = vweird.f32 %v877
  %vm884 = vmor %vm882, %vm883
  %v885 = vsel %vm884, %v877, %v881
  %v886 = vand.u32 2147483647, %v861
  %vm887 = vcmp.eq.f32.partialorder %v886, 8.507059e+37
  %v888 = vand.u32 %v861, 2147483648
  %v889 = vor.u32 1.1754944e-38, %v888
  %v890 = vsel %vm887, %v889, %v885
  %v891 = vmul.f32 1.0, %v890
  %v892 = vrcp.pop %v862
  %v893 = vmul.f32 %v862, %v892
  %v894 = vsub.f32 1.0, %v893
  %v895 = vmul.f32 %v892, %v894
  %v896 = vadd.f32 %v892, %v895
  %vm897 = vweird.f32 %v862
  %vm898 = vweird.f32 %v892
  %vm899 = vmor %vm897, %vm898
  %v900 = vsel %vm899, %v892, %v896
  %v901 = vand.u32 2147483647, %v862
  %vm902 = vcmp.eq.f32.partialorder %v901, 8.507059e+37
  %v903 = vand.u32 %v862, 2147483648
  %v904 = vor.u32 1.1754944e-38, %v903
  %v905 = vsel %vm902, %v904, %v900
  %v906 = vmul.f32 1.0, %v905
  %v907 = vrcp.pop %v863
  %v908 = vmul.f32 %v863, %v907
  %v909 = vsub.f32 1.0, %v908
  %v910 = vmul.f32 %v907, %v909
  %v911 = vadd.f32 %v907, %v910
  %vm912 = vweird.f32 %v863
  %vm913 = vweird.f32 %v907
  %vm914 = vmor %vm912, %vm913
  %v915 = vsel %vm914, %v907, %v911
  %v916 = vand.u32 2147483647, %v863
  %vm917 = vcmp.eq.f32.partialorder %v916, 8.507059e+37
  %v918 = vand.u32 %v863, 2147483648
  %v919 = vor.u32 1.1754944e-38, %v918
  %v920 = vsel %vm917, %v919, %v915
  %v921 = vmul.f32 1.0, %v920
  %v922 = vrcp.pop %v864
  %v923 = vmul.f32 %v864, %v922
  %v924 = vsub.f32 1.0, %v923
  %v925 = vmul.f32 %v922, %v924
  %v926 = vadd.f32 %v922, %v925
  %vm927 = vweird.f32 %v864
  %vm928 = vweird.f32 %v922
  %vm929 = vmor %vm927, %vm928
  %v930 = vsel %vm929, %v922, %v926
  %v931 = vand.u32 2147483647, %v864
  %vm932 = vcmp.eq.f32.partialorder %v931, 8.507059e+37
  %v933 = vand.u32 %v864, 2147483648
  %v934 = vor.u32 1.1754944e-38, %v933
  %v935 = vsel %vm932, %v934, %v930
  %v936 = vmul.f32 1.0, %v935
  %v937 = vrcp.pop %v865
  %v938 = vmul.f32 %v865, %v937
  %v939 = vsub.f32 1.0, %v938
  %v940 = vmul.f32 %v937, %v939
  %v941 = vadd.f32 %v937, %v940
  %vm942 = vweird.f32 %v865
  %vm943 = vweird.f32 %v937
  %vm944 = vmor %vm942, %vm943
  %v945 = vsel %vm944, %v937, %v941
  %v946 = vand.u32 2147483647, %v865
  %vm947 = vcmp.eq.f32.partialorder %v946, 8.507059e+37
  %v948 = vand.u32 %v865, 2147483648
  %v949 = vor.u32 1.1754944e-38, %v948
  %v950 = vsel %vm947, %v949, %v945
  %v951 = vmul.f32 1.0, %v950
  %v952 = vrcp.pop %v866
  %v953 = vmul.f32 %v866, %v952
  %v954 = vsub.f32 1.0, %v953
  %v955 = vmul.f32 %v952, %v954
  %v956 = vadd.f32 %v952, %v955
  %vm957 = vweird.f32 %v866
  %vm958 = vweird.f32 %v952
  %vm959 = vmor %vm957, %vm958
  %v960 = vsel %vm959, %v952, %v956
  %v961 = vand.u32 2147483647, %v866
  %vm962 = vcmp.eq.f32.partialorder %v961, 8.507059e+37
  %v963 = vand.u32 %v866, 2147483648
  %v964 = vor.u32 1.1754944e-38, %v963
  %v965 = vsel %vm962, %v964, %v960
  %v966 = vmul.f32 1.0, %v965
  %v967 = vrcp.pop %v867
  %v968 = vmul.f32 %v867, %v967
  %v969 = vsub.f32 1.0, %v968
  %v970 = vmul.f32 %v967, %v969
  %v971 = vadd.f32 %v967, %v970
  %vm972 = vweird.f32 %v867
  %vm973 = vweird.f32 %v967
  %vm974 = vmor %vm972, %vm973
  %v975 = vsel %vm974, %v967, %v971
  %v976 = vand.u32 2147483647, %v867
  %vm977 = vcmp.eq.f32.partialorder %v976, 8.507059e+37
  %v978 = vand.u32 %v867, 2147483648
  %v979 = vor.u32 1.1754944e-38, %v978
  %v980 = vsel %vm977, %v979, %v975
  %v981 = vmul.f32 1.0, %v980
  %v982 = vrcp.pop %v868
  %v983 = vmul.f32 %v868, %v982
  %v984 = vsub.f32 1.0, %v983
  %v985 = vmul.f32 %v982, %v984
  %v986 = vadd.f32 %v982, %v985
  %vm987 = vweird.f32 %v868
  %vm988 = vweird.f32 %v982
  %vm989 = vmor %vm987, %vm988
  %v990 = vsel %vm989, %v982, %v986
  %v991 = vand.u32 2147483647, %v868
  %vm992 = vcmp.eq.f32.partialorder %v991, 8.507059e+37
  %v993 = vand.u32 %v868, 2147483648
  %v994 = vor.u32 1.1754944e-38, %v993
  %v995 = vsel %vm992, %v994, %v990
  %v996 = vmul.f32 1.0, %v995
  %v997 = vrcp.pop %v869
  %v998 = vmul.f32 %v869, %v997
  %v999 = vsub.f32 1.0, %v998
  %v1000 = vmul.f32 %v997, %v999
  %v1001 = vadd.f32 %v997, %v1000
  %vm1002 = vweird.f32 %v869
  %vm1003 = vweird.f32 %v997
  %vm1004 = vmor %vm1002, %vm1003
  %v1005 = vsel %vm1004, %v997, %v1001
  %v1006 = vand.u32 2147483647, %v869
  %vm1007 = vcmp.eq.f32.partialorder %v1006, 8.507059e+37
  %v1008 = vand.u32 %v869, 2147483648
  %v1009 = vor.u32 1.1754944e-38, %v1008
  %v1010 = vsel %vm1007, %v1009, %v1005
  %v1011 = vmul.f32 1.0, %v1010
  %v1012 = vrcp.pop %v870
  %v1013 = vmul.f32 %v870, %v1012
  %v1014 = vsub.f32 1.0, %v1013
  %v1015 = vmul.f32 %v1012, %v1014
  %v1016 = vadd.f32 %v1012, %v1015
  %vm1017 = vweird.f32 %v870
  %vm1018 = vweird.f32 %v1012
  %vm1019 = vmor %vm1017, %vm1018
  %v1020 = vsel %vm1019, %v1012, %v1016
  %v1021 = vand.u32 2147483647, %v870
  %vm1022 = vcmp.eq.f32.partialorder %v1021, 8.507059e+37
  %v1023 = vand.u32 %v870, 2147483648
  %v1024 = vor.u32 1.1754944e-38, %v1023
  %v1025 = vsel %vm1022, %v1024, %v1020
  %v1026 = vmul.f32 1.0, %v1025
  %v1027 = vrcp.pop %v871
  %v1028 = vmul.f32 %v871, %v1027
  %v1029 = vsub.f32 1.0, %v1028
  %v1030 = vmul.f32 %v1027, %v1029
  %v1031 = vadd.f32 %v1027, %v1030
  %vm1032 = vweird.f32 %v871
  %vm1033 = vweird.f32 %v1027
  %vm1034 = vmor %vm1032, %vm1033
  %v1035 = vsel %vm1034, %v1027, %v1031
  %v1036 = vand.u32 2147483647, %v871
  %vm1037 = vcmp.eq.f32.partialorder %v1036, 8.507059e+37
  %v1038 = vand.u32 %v871, 2147483648
  %v1039 = vor.u32 1.1754944e-38, %v1038
  %v1040 = vsel %vm1037, %v1039, %v1035
  %v1041 = vmul.f32 1.0, %v1040
  %v1042 = vrcp.pop %v872
  %v1043 = vmul.f32 %v872, %v1042
  %v1044 = vsub.f32 1.0, %v1043
  %v1045 = vmul.f32 %v1042, %v1044
  %v1046 = vadd.f32 %v1042, %v1045
  %vm1047 = vweird.f32 %v872
  %vm1048 = vweird.f32 %v1042
  %vm1049 = vmor %vm1047, %vm1048
  %v1050 = vsel %vm1049, %v1042, %v1046
  %v1051 = vand.u32 2147483647, %v872
  %vm1052 = vcmp.eq.f32.partialorder %v1051, 8.507059e+37
  %v1053 = vand.u32 %v872, 2147483648
  %v1054 = vor.u32 1.1754944e-38, %v1053
  %v1055 = vsel %vm1052, %v1054, %v1050
  %v1056 = vmul.f32 1.0, %v1055
  %v1057 = vrcp.pop %v873
  %v1058 = vmul.f32 %v873, %v1057
  %v1059 = vsub.f32 1.0, %v1058
  %v1060 = vmul.f32 %v1057, %v1059
  %v1061 = vadd.f32 %v1057, %v1060
  %vm1062 = vweird.f32 %v873
  %vm1063 = vweird.f32 %v1057
  %vm1064 = vmor %vm1062, %vm1063
  %v1065 = vsel %vm1064, %v1057, %v1061
  %v1066 = vand.u32 2147483647, %v873
  %vm1067 = vcmp.eq.f32.partialorder %v1066, 8.507059e+37
  %v1068 = vand.u32 %v873, 2147483648
  %v1069 = vor.u32 1.1754944e-38, %v1068
  %v1070 = vsel %vm1067, %v1069, %v1065
  %v1071 = vmul.f32 1.0, %v1070
  %v1072 = vrcp.pop %v874
  %v1073 = vmul.f32 %v874, %v1072
  %v1074 = vsub.f32 1.0, %v1073
  %v1075 = vmul.f32 %v1072, %v1074
  %v1076 = vadd.f32 %v1072, %v1075
  %vm1077 = vweird.f32 %v874
  %vm1078 = vweird.f32 %v1072
  %vm1079 = vmor %vm1077, %vm1078
  %v1080 = vsel %vm1079, %v1072, %v1076
  %v1081 = vand.u32 2147483647, %v874
  %vm1082 = vcmp.eq.f32.partialorder %v1081, 8.507059e+37
  %v1083 = vand.u32 %v874, 2147483648
  %v1084 = vor.u32 1.1754944e-38, %v1083
  %v1085 = vsel %vm1082, %v1084, %v1080
  %v1086 = vmul.f32 1.0, %v1085
  %v1087 = vrcp.pop %v875
  %v1088 = vmul.f32 %v875, %v1087
  %v1089 = vsub.f32 1.0, %v1088
  %v1090 = vmul.f32 %v1087, %v1089
  %v1091 = vadd.f32 %v1087, %v1090
  %vm1092 = vweird.f32 %v875
  %vm1093 = vweird.f32 %v1087
  %vm1094 = vmor %vm1092, %vm1093
  %v1095 = vsel %vm1094, %v1087, %v1091
  %v1096 = vand.u32 2147483647, %v875
  %vm1097 = vcmp.eq.f32.partialorder %v1096, 8.507059e+37
  %v1098 = vand.u32 %v875, 2147483648
  %v1099 = vor.u32 1.1754944e-38, %v1098
  %v1100 = vsel %vm1097, %v1099, %v1095
  %v1101 = vmul.f32 1.0, %v1100
  %v1102 = vrcp.pop %v876
  %v1103 = vmul.f32 %v876, %v1102
  %v1104 = vsub.f32 1.0, %v1103
  %v1105 = vmul.f32 %v1102, %v1104
  %v1106 = vadd.f32 %v1102, %v1105
  %vm1107 = vweird.f32 %v876
  %vm1108 = vweird.f32 %v1102
  %vm1109 = vmor %vm1107, %vm1108
  %v1110 = vsel %vm1109, %v1102, %v1106
  %v1111 = vand.u32 2147483647, %v876
  %vm1112 = vcmp.eq.f32.partialorder %v1111, 8.507059e+37
  %v1113 = vand.u32 %v876, 2147483648
  %v1114 = vor.u32 1.1754944e-38, %v1113
  %v1115 = vsel %vm1112, %v1114, %v1110
  %v1116 = vmul.f32 1.0, %v1115
  %1117 = vst [vmem:[%s6] sm:$0xff] %v891
  %1118 = vst [vmem:[%s6 + $0x8] sm:$0xff] %v906
  %1119 = vst [vmem:[%s6 + $0x10] sm:$0xff] %v921
  %1120 = vst [vmem:[%s6 + $0x18] sm:$0xff] %v936
  %1121 = vst [vmem:[%s6 + $0x20] sm:$0xff] %v951
  %1122 = vst [vmem:[%s6 + $0x28] sm:$0xff] %v966
  %1123 = vst [vmem:[%s6 + $0x30] sm:$0xff] %v981
  %1124 = vst [vmem:[%s6 + $0x38] sm:$0xff] %v996
  %1125 = vst [vmem:[%s6 + $0x40] sm:$0xff] %v1011
  %1126 = vst [vmem:[%s6 + $0x48] sm:$0xff] %v1026
  %1127 = vst [vmem:[%s6 + $0x50] sm:$0xff] %v1041
  %1128 = vst [vmem:[%s6 + $0x58] sm:$0xff] %v1056
  %1129 = vst [vmem:[%s6 + $0x60] sm:$0xff] %v1071
  %1130 = vst [vmem:[%s6 + $0x68] sm:$0xff] %v1086
  %1131 = vst [vmem:[%s6 + $0x70] sm:$0xff] %v1101
  %1132 = vst [vmem:[%s6 + $0x78] sm:$0xff] %v1116
  %v1133 = vlaneseq
  %v1134 = vand.u32 %v1133, 127
  %vm1135 = vcmp.lt.s32.totalorder %v1134, 8
  %v1136 = vsel %vm1135, %v891, 0.0
  %v1137 = vsel %vm1135, %v906, 0.0
  %v1138 = vsel %vm1135, %v921, 0.0
  %v1139 = vsel %vm1135, %v936, 0.0
  %v1140 = vsel %vm1135, %v951, 0.0
  %v1141 = vsel %vm1135, %v966, 0.0
  %v1142 = vsel %vm1135, %v981, 0.0
  %v1143 = vsel %vm1135, %v996, 0.0
  %v1144 = vsel %vm1135, %v1011, 0.0
  %v1145 = vsel %vm1135, %v1026, 0.0
  %v1146 = vsel %vm1135, %v1041, 0.0
  %v1147 = vsel %vm1135, %v1056, 0.0
  %v1148 = vsel %vm1135, %v1071, 0.0
  %v1149 = vsel %vm1135, %v1086, 0.0
  %v1150 = vsel %vm1135, %v1101, 0.0
  %v1151 = vsel %vm1135, %v1116, 0.0
  %v1152 = vpack.c.bf16 %v1137, %v1136
  %v1153 = vpack.c.bf16 %v1139, %v1138
  %v1154 = vpack.c.bf16 %v1141, %v1140
  %v1155 = vpack.c.bf16 %v1143, %v1142
  %v1156 = vpack.c.bf16 %v1145, %v1144
  %v1157 = vpack.c.bf16 %v1147, %v1146
  %v1158 = vpack.c.bf16 %v1149, %v1148
  %v1159 = vpack.c.bf16 %v1151, %v1150
  %1160 = vmatpush.bf16.xpose.msra.mxu0 %v1159
  %1161 = vmatpush.bf16.xpose.msra.mxu0 %v1158
  %1162 = vmatpush.bf16.xpose.msra.mxu0 %v1157
  %1163 = vmatpush.bf16.xpose.msra.mxu0 %v1156
  %1164 = vmatpush.bf16.xpose.msra.mxu0 %v1155
  %1165 = vmatpush.bf16.xpose.msra.mxu0 %v1154
  %1166 = vmatpush.bf16.xpose.msra.mxu0 %v1153
  %1167 = vmatpush.bf16.xpose.msra.mxu0 %v1152
  %1168 = vmatmul.bf16.gmra.mxu0 %v1152
  %v1169 = vpop.f32.mrf.mxu0
  %v1170 = vadd.f32 0.0, %v1169
  %v1171 = vpop.f32.mrf.mxu0
  %v1172 = vadd.f32 0.0, %v1171
  %1173 = vmatmul.bf16.gmra.mxu0 %v1153
  %v1174 = vpop.f32.mrf.mxu0
  %v1175 = vadd.f32 0.0, %v1174
  %v1176 = vpop.f32.mrf.mxu0
  %v1177 = vadd.f32 0.0, %v1176
  %1178 = vmatmul.bf16.gmra.mxu0 %v1154
  %v1179 = vpop.f32.mrf.mxu0
  %v1180 = vadd.f32 0.0, %v1179
  %v1181 = vpop.f32.mrf.mxu0
  %v1182 = vadd.f32 0.0, %v1181
  %1183 = vmatmul.bf16.gmra.mxu0 %v1155
  %v1184 = vpop.f32.mrf.mxu0
  %v1185 = vadd.f32 0.0, %v1184
  %v1186 = vpop.f32.mrf.mxu0
  %v1187 = vadd.f32 0.0, %v1186
  %1188 = vmatmul.bf16.gmra.mxu0 %v1156
  %v1189 = vpop.f32.mrf.mxu0
  %v1190 = vadd.f32 0.0, %v1189
  %v1191 = vpop.f32.mrf.mxu0
  %v1192 = vadd.f32 0.0, %v1191
  %1193 = vmatmul.bf16.gmra.mxu0 %v1157
  %v1194 = vpop.f32.mrf.mxu0
  %v1195 = vadd.f32 0.0, %v1194
  %v1196 = vpop.f32.mrf.mxu0
  %v1197 = vadd.f32 0.0, %v1196
  %1198 = vmatmul.bf16.gmra.mxu0 %v1158
  %v1199 = vpop.f32.mrf.mxu0
  %v1200 = vadd.f32 0.0, %v1199
  %v1201 = vpop.f32.mrf.mxu0
  %v1202 = vadd.f32 0.0, %v1201
  %1203 = vmatmul.bf16.gmra.mxu0 %v1159
  %v1204 = vpop.f32.mrf.mxu0
  %v1205 = vadd.f32 0.0, %v1204
  %v1206 = vpop.f32.mrf.mxu0
  %v1207 = vadd.f32 0.0, %v1206
  %1208 = vdwg.mxu0
  %v1209 = vxor.u32 %v1170, 2147483648
  %v1210 = vxor.u32 %v1172, 2147483648
  %v1211 = vxor.u32 %v1175, 2147483648
  %v1212 = vxor.u32 %v1177, 2147483648
  %v1213 = vxor.u32 %v1180, 2147483648
  %v1214 = vxor.u32 %v1182, 2147483648
  %v1215 = vxor.u32 %v1185, 2147483648
  %v1216 = vxor.u32 %v1187, 2147483648
  %v1217 = vxor.u32 %v1190, 2147483648
  %v1218 = vxor.u32 %v1192, 2147483648
  %v1219 = vxor.u32 %v1195, 2147483648
  %v1220 = vxor.u32 %v1197, 2147483648
  %v1221 = vxor.u32 %v1200, 2147483648
  %v1222 = vxor.u32 %v1202, 2147483648
  %v1223 = vxor.u32 %v1205, 2147483648
  %v1224 = vxor.u32 %v1207, 2147483648
  %v1225 = vmul.f32 %v1209, 1.442695
  %v1226 = vpow.pop %v1225
  %v1227 = vmul.f32 %v1210, 1.442695
  %v1228 = vpow.pop %v1227
  %v1229 = vmul.f32 %v1211, 1.442695
  %v1230 = vpow.pop %v1229
  %v1231 = vmul.f32 %v1212, 1.442695
  %v1232 = vpow.pop %v1231
  %v1233 = vmul.f32 %v1213, 1.442695
  %v1234 = vpow.pop %v1233
  %v1235 = vmul.f32 %v1214, 1.442695
  %v1236 = vpow.pop %v1235
  %v1237 = vmul.f32 %v1215, 1.442695
  %v1238 = vpow.pop %v1237
  %v1239 = vmul.f32 %v1216, 1.442695
  %v1240 = vpow.pop %v1239
  %v1241 = vmul.f32 %v1217, 1.442695
  %v1242 = vpow.pop %v1241
  %v1243 = vmul.f32 %v1218, 1.442695
  %v1244 = vpow.pop %v1243
  %v1245 = vmul.f32 %v1219, 1.442695
  %v1246 = vpow.pop %v1245
  %v1247 = vmul.f32 %v1220, 1.442695
  %v1248 = vpow.pop %v1247
  %v1249 = vmul.f32 %v1221, 1.442695
  %v1250 = vpow.pop %v1249
  %v1251 = vmul.f32 %v1222, 1.442695
  %v1252 = vpow.pop %v1251
  %v1253 = vmul.f32 %v1223, 1.442695
  %v1254 = vpow.pop %v1253
  %v1255 = vmul.f32 %v1224, 1.442695
  %v1256 = vpow.pop %v1255
  %v1257 = vadd.f32 %v1226, 1.0
  %v1258 = vadd.f32 %v1228, 1.0
  %v1259 = vadd.f32 %v1230, 1.0
  %v1260 = vadd.f32 %v1232, 1.0
  %v1261 = vadd.f32 %v1234, 1.0
  %v1262 = vadd.f32 %v1236, 1.0
  %v1263 = vadd.f32 %v1238, 1.0
  %v1264 = vadd.f32 %v1240, 1.0
  %v1265 = vadd.f32 %v1242, 1.0
  %v1266 = vadd.f32 %v1244, 1.0
  %v1267 = vadd.f32 %v1246, 1.0
  %v1268 = vadd.f32 %v1248, 1.0
  %v1269 = vadd.f32 %v1250, 1.0
  %v1270 = vadd.f32 %v1252, 1.0
  %v1271 = vadd.f32 %v1254, 1.0
  %v1272 = vadd.f32 %v1256, 1.0
  %v1273 = vrcp.pop %v1257
  %v1274 = vmul.f32 %v1257, %v1273
  %v1275 = vsub.f32 1.0, %v1274
  %v1276 = vmul.f32 %v1273, %v1275
  %v1277 = vadd.f32 %v1273, %v1276
  %vm1278 = vweird.f32 %v1257
  %vm1279 = vweird.f32 %v1273
  %vm1280 = vmor %vm1278, %vm1279
  %v1281 = vsel %vm1280, %v1273, %v1277
  %v1282 = vand.u32 2147483647, %v1257
  %vm1283 = vcmp.eq.f32.partialorder %v1282, 8.507059e+37
  %v1284 = vand.u32 %v1257, 2147483648
  %v1285 = vor.u32 1.1754944e-38, %v1284
  %v1286 = vsel %vm1283, %v1285, %v1281
  %v1287 = vmul.f32 1.0, %v1286
  %v1288 = vrcp.pop %v1258
  %v1289 = vmul.f32 %v1258, %v1288
  %v1290 = vsub.f32 1.0, %v1289
  %v1291 = vmul.f32 %v1288, %v1290
  %v1292 = vadd.f32 %v1288, %v1291
  %vm1293 = vweird.f32 %v1258
  %vm1294 = vweird.f32 %v1288
  %vm1295 = vmor %vm1293, %vm1294
  %v1296 = vsel %vm1295, %v1288, %v1292
  %v1297 = vand.u32 2147483647, %v1258
  %vm1298 = vcmp.eq.f32.partialorder %v1297, 8.507059e+37
  %v1299 = vand.u32 %v1258, 2147483648
  %v1300 = vor.u32 1.1754944e-38, %v1299
  %v1301 = vsel %vm1298, %v1300, %v1296
  %v1302 = vmul.f32 1.0, %v1301
  %v1303 = vrcp.pop %v1259
  %v1304 = vmul.f32 %v1259, %v1303
  %v1305 = vsub.f32 1.0, %v1304
  %v1306 = vmul.f32 %v1303, %v1305
  %v1307 = vadd.f32 %v1303, %v1306
  %vm1308 = vweird.f32 %v1259
  %vm1309 = vweird.f32 %v1303
  %vm1310 = vmor %vm1308, %vm1309
  %v1311 = vsel %vm1310, %v1303, %v1307
  %v1312 = vand.u32 2147483647, %v1259
  %vm1313 = vcmp.eq.f32.partialorder %v1312, 8.507059e+37
  %v1314 = vand.u32 %v1259, 2147483648
  %v1315 = vor.u32 1.1754944e-38, %v1314
  %v1316 = vsel %vm1313, %v1315, %v1311
  %v1317 = vmul.f32 1.0, %v1316
  %v1318 = vrcp.pop %v1260
  %v1319 = vmul.f32 %v1260, %v1318
  %v1320 = vsub.f32 1.0, %v1319
  %v1321 = vmul.f32 %v1318, %v1320
  %v1322 = vadd.f32 %v1318, %v1321
  %vm1323 = vweird.f32 %v1260
  %vm1324 = vweird.f32 %v1318
  %vm1325 = vmor %vm1323, %vm1324
  %v1326 = vsel %vm1325, %v1318, %v1322
  %v1327 = vand.u32 2147483647, %v1260
  %vm1328 = vcmp.eq.f32.partialorder %v1327, 8.507059e+37
  %v1329 = vand.u32 %v1260, 2147483648
  %v1330 = vor.u32 1.1754944e-38, %v1329
  %v1331 = vsel %vm1328, %v1330, %v1326
  %v1332 = vmul.f32 1.0, %v1331
  %v1333 = vrcp.pop %v1261
  %v1334 = vmul.f32 %v1261, %v1333
  %v1335 = vsub.f32 1.0, %v1334
  %v1336 = vmul.f32 %v1333, %v1335
  %v1337 = vadd.f32 %v1333, %v1336
  %vm1338 = vweird.f32 %v1261
  %vm1339 = vweird.f32 %v1333
  %vm1340 = vmor %vm1338, %vm1339
  %v1341 = vsel %vm1340, %v1333, %v1337
  %v1342 = vand.u32 2147483647, %v1261
  %vm1343 = vcmp.eq.f32.partialorder %v1342, 8.507059e+37
  %v1344 = vand.u32 %v1261, 2147483648
  %v1345 = vor.u32 1.1754944e-38, %v1344
  %v1346 = vsel %vm1343, %v1345, %v1341
  %v1347 = vmul.f32 1.0, %v1346
  %v1348 = vrcp.pop %v1262
  %v1349 = vmul.f32 %v1262, %v1348
  %v1350 = vsub.f32 1.0, %v1349
  %v1351 = vmul.f32 %v1348, %v1350
  %v1352 = vadd.f32 %v1348, %v1351
  %vm1353 = vweird.f32 %v1262
  %vm1354 = vweird.f32 %v1348
  %vm1355 = vmor %vm1353, %vm1354
  %v1356 = vsel %vm1355, %v1348, %v1352
  %v1357 = vand.u32 2147483647, %v1262
  %vm1358 = vcmp.eq.f32.partialorder %v1357, 8.507059e+37
  %v1359 = vand.u32 %v1262, 2147483648
  %v1360 = vor.u32 1.1754944e-38, %v1359
  %v1361 = vsel %vm1358, %v1360, %v1356
  %v1362 = vmul.f32 1.0, %v1361
  %v1363 = vrcp.pop %v1263
  %v1364 = vmul.f32 %v1263, %v1363
  %v1365 = vsub.f32 1.0, %v1364
  %v1366 = vmul.f32 %v1363, %v1365
  %v1367 = vadd.f32 %v1363, %v1366
  %vm1368 = vweird.f32 %v1263
  %vm1369 = vweird.f32 %v1363
  %vm1370 = vmor %vm1368, %vm1369
  %v1371 = vsel %vm1370, %v1363, %v1367
  %v1372 = vand.u32 2147483647, %v1263
  %vm1373 = vcmp.eq.f32.partialorder %v1372, 8.507059e+37
  %v1374 = vand.u32 %v1263, 2147483648
  %v1375 = vor.u32 1.1754944e-38, %v1374
  %v1376 = vsel %vm1373, %v1375, %v1371
  %v1377 = vmul.f32 1.0, %v1376
  %v1378 = vrcp.pop %v1264
  %v1379 = vmul.f32 %v1264, %v1378
  %v1380 = vsub.f32 1.0, %v1379
  %v1381 = vmul.f32 %v1378, %v1380
  %v1382 = vadd.f32 %v1378, %v1381
  %vm1383 = vweird.f32 %v1264
  %vm1384 = vweird.f32 %v1378
  %vm1385 = vmor %vm1383, %vm1384
  %v1386 = vsel %vm1385, %v1378, %v1382
  %v1387 = vand.u32 2147483647, %v1264
  %vm1388 = vcmp.eq.f32.partialorder %v1387, 8.507059e+37
  %v1389 = vand.u32 %v1264, 2147483648
  %v1390 = vor.u32 1.1754944e-38, %v1389
  %v1391 = vsel %vm1388, %v1390, %v1386
  %v1392 = vmul.f32 1.0, %v1391
  %v1393 = vrcp.pop %v1265
  %v1394 = vmul.f32 %v1265, %v1393
  %v1395 = vsub.f32 1.0, %v1394
  %v1396 = vmul.f32 %v1393, %v1395
  %v1397 = vadd.f32 %v1393, %v1396
  %vm1398 = vweird.f32 %v1265
  %vm1399 = vweird.f32 %v1393
  %vm1400 = vmor %vm1398, %vm1399
  %v1401 = vsel %vm1400, %v1393, %v1397
  %v1402 = vand.u32 2147483647, %v1265
  %vm1403 = vcmp.eq.f32.partialorder %v1402, 8.507059e+37
  %v1404 = vand.u32 %v1265, 2147483648
  %v1405 = vor.u32 1.1754944e-38, %v1404
  %v1406 = vsel %vm1403, %v1405, %v1401
  %v1407 = vmul.f32 1.0, %v1406
  %v1408 = vrcp.pop %v1266
  %v1409 = vmul.f32 %v1266, %v1408
  %v1410 = vsub.f32 1.0, %v1409
  %v1411 = vmul.f32 %v1408, %v1410
  %v1412 = vadd.f32 %v1408, %v1411
  %vm1413 = vweird.f32 %v1266
  %vm1414 = vweird.f32 %v1408
  %vm1415 = vmor %vm1413, %vm1414
  %v1416 = vsel %vm1415, %v1408, %v1412
  %v1417 = vand.u32 2147483647, %v1266
  %vm1418 = vcmp.eq.f32.partialorder %v1417, 8.507059e+37
  %v1419 = vand.u32 %v1266, 2147483648
  %v1420 = vor.u32 1.1754944e-38, %v1419
  %v1421 = vsel %vm1418, %v1420, %v1416
  %v1422 = vmul.f32 1.0, %v1421
  %v1423 = vrcp.pop %v1267
  %v1424 = vmul.f32 %v1267, %v1423
  %v1425 = vsub.f32 1.0, %v1424
  %v1426 = vmul.f32 %v1423, %v1425
  %v1427 = vadd.f32 %v1423, %v1426
  %vm1428 = vweird.f32 %v1267
  %vm1429 = vweird.f32 %v1423
  %vm1430 = vmor %vm1428, %vm1429
  %v1431 = vsel %vm1430, %v1423, %v1427
  %v1432 = vand.u32 2147483647, %v1267
  %vm1433 = vcmp.eq.f32.partialorder %v1432, 8.507059e+37
  %v1434 = vand.u32 %v1267, 2147483648
  %v1435 = vor.u32 1.1754944e-38, %v1434
  %v1436 = vsel %vm1433, %v1435, %v1431
  %v1437 = vmul.f32 1.0, %v1436
  %v1438 = vrcp.pop %v1268
  %v1439 = vmul.f32 %v1268, %v1438
  %v1440 = vsub.f32 1.0, %v1439
  %v1441 = vmul.f32 %v1438, %v1440
  %v1442 = vadd.f32 %v1438, %v1441
  %vm1443 = vweird.f32 %v1268
  %vm1444 = vweird.f32 %v1438
  %vm1445 = vmor %vm1443, %vm1444
  %v1446 = vsel %vm1445, %v1438, %v1442
  %v1447 = vand.u32 2147483647, %v1268
  %vm1448 = vcmp.eq.f32.partialorder %v1447, 8.507059e+37
  %v1449 = vand.u32 %v1268, 2147483648
  %v1450 = vor.u32 1.1754944e-38, %v1449
  %v1451 = vsel %vm1448, %v1450, %v1446
  %v1452 = vmul.f32 1.0, %v1451
  %v1453 = vrcp.pop %v1269
  %v1454 = vmul.f32 %v1269, %v1453
  %v1455 = vsub.f32 1.0, %v1454
  %v1456 = vmul.f32 %v1453, %v1455
  %v1457 = vadd.f32 %v1453, %v1456
  %vm1458 = vweird.f32 %v1269
  %vm1459 = vweird.f32 %v1453
  %vm1460 = vmor %vm1458, %vm1459
  %v1461 = vsel %vm1460, %v1453, %v1457
  %v1462 = vand.u32 2147483647, %v1269
  %vm1463 = vcmp.eq.f32.partialorder %v1462, 8.507059e+37
  %v1464 = vand.u32 %v1269, 2147483648
  %v1465 = vor.u32 1.1754944e-38, %v1464
  %v1466 = vsel %vm1463, %v1465, %v1461
  %v1467 = vmul.f32 1.0, %v1466
  %v1468 = vrcp.pop %v1270
  %v1469 = vmul.f32 %v1270, %v1468
  %v1470 = vsub.f32 1.0, %v1469
  %v1471 = vmul.f32 %v1468, %v1470
  %v1472 = vadd.f32 %v1468, %v1471
  %vm1473 = vweird.f32 %v1270
  %vm1474 = vweird.f32 %v1468
  %vm1475 = vmor %vm1473, %vm1474
  %v1476 = vsel %vm1475, %v1468, %v1472
  %v1477 = vand.u32 2147483647, %v1270
  %vm1478 = vcmp.eq.f32.partialorder %v1477, 8.507059e+37
  %v1479 = vand.u32 %v1270, 2147483648
  %v1480 = vor.u32 1.1754944e-38, %v1479
  %v1481 = vsel %vm1478, %v1480, %v1476
  %v1482 = vmul.f32 1.0, %v1481
  %v1483 = vrcp.pop %v1271
  %v1484 = vmul.f32 %v1271, %v1483
  %v1485 = vsub.f32 1.0, %v1484
  %v1486 = vmul.f32 %v1483, %v1485
  %v1487 = vadd.f32 %v1483, %v1486
  %vm1488 = vweird.f32 %v1271
  %vm1489 = vweird.f32 %v1483
  %vm1490 = vmor %vm1488, %vm1489
  %v1491 = vsel %vm1490, %v1483, %v1487
  %v1492 = vand.u32 2147483647, %v1271
  %vm1493 = vcmp.eq.f32.partialorder %v1492, 8.507059e+37
  %v1494 = vand.u32 %v1271, 2147483648
  %v1495 = vor.u32 1.1754944e-38, %v1494
  %v1496 = vsel %vm1493, %v1495, %v1491
  %v1497 = vmul.f32 1.0, %v1496
  %v1498 = vrcp.pop %v1272
  %v1499 = vmul.f32 %v1272, %v1498
  %v1500 = vsub.f32 1.0, %v1499
  %v1501 = vmul.f32 %v1498, %v1500
  %v1502 = vadd.f32 %v1498, %v1501
  %vm1503 = vweird.f32 %v1272
  %vm1504 = vweird.f32 %v1498
  %vm1505 = vmor %vm1503, %vm1504
  %v1506 = vsel %vm1505, %v1498, %v1502
  %v1507 = vand.u32 2147483647, %v1272
  %vm1508 = vcmp.eq.f32.partialorder %v1507, 8.507059e+37
  %v1509 = vand.u32 %v1272, 2147483648
  %v1510 = vor.u32 1.1754944e-38, %v1509
  %v1511 = vsel %vm1508, %v1510, %v1506
  %v1512 = vmul.f32 1.0, %v1511
  %1513 = vst [vmem:[%s7] sm:$0xff] %v1287
  %1514 = vst [vmem:[%s7 + $0x8] sm:$0xff] %v1302
  %1515 = vst [vmem:[%s7 + $0x10] sm:$0xff] %v1317
  %1516 = vst [vmem:[%s7 + $0x18] sm:$0xff] %v1332
  %1517 = vst [vmem:[%s7 + $0x20] sm:$0xff] %v1347
  %1518 = vst [vmem:[%s7 + $0x28] sm:$0xff] %v1362
  %1519 = vst [vmem:[%s7 + $0x30] sm:$0xff] %v1377
  %1520 = vst [vmem:[%s7 + $0x38] sm:$0xff] %v1392
  %1521 = vst [vmem:[%s7 + $0x40] sm:$0xff] %v1407
  %1522 = vst [vmem:[%s7 + $0x48] sm:$0xff] %v1422
  %1523 = vst [vmem:[%s7 + $0x50] sm:$0xff] %v1437
  %1524 = vst [vmem:[%s7 + $0x58] sm:$0xff] %v1452
  %1525 = vst [vmem:[%s7 + $0x60] sm:$0xff] %v1467
  %1526 = vst [vmem:[%s7 + $0x68] sm:$0xff] %v1482
  %1527 = vst [vmem:[%s7 + $0x70] sm:$0xff] %v1497
  %1528 = vst [vmem:[%s7 + $0x78] sm:$0xff] %v1512
  // Predicated region
  $region26: #{ae_forward.1} parent=0 // pred_check
    _
  $region27: #{ae_forward.1} parent=0 // pred_check_branch
    %1530 = sbr.rel (0) target = $region29
  $region28: #{ae_forward.1} parent=0 // pred_region
    _
  $region29: #{ae_forward.1} parent=0 // pred_fallthru
    _
  // Predicated region
  $region30: #{ae_forward.1} parent=0 // pred_check
    _
  $region31: #{ae_forward.1} parent=0 // pred_check_branch
    %1532 = sbr.rel (0) target = $region33
  $region32: #{ae_forward.1} parent=0 // pred_region
    _
  $region33: #{ae_forward.1} parent=0 // pred_fallthru
    _
  // Predicated region
  $region34: #{ae_forward.1} parent=0 // pred_check
    _
  $region35: #{ae_forward.1} parent=0 // pred_check_branch
    %1534 = sbr.rel (0) target = $region37
  $region36: #{ae_forward.1} parent=0 // pred_region
    _
  $region37: #{ae_forward.1} parent=0 // pred_fallthru
    _
  // Predicated region
  $region38: #{ae_forward.1} parent=0 // pred_check
    _
  $region39: #{ae_forward.1} parent=0 // pred_check_branch
    %1536 = sbr.rel (0) target = $region41
  $region40: #{ae_forward.1} parent=0 // pred_region
    _
  $region41: #{ae_forward.1} parent=0 // pred_fallthru
    _

</llo_original>
